<compile_context>
chip_gen: v5e
topology: v5e:2x2
jax: 0.10.0
libtpu: 0.0.40
codegen_flags: <defaults>
</compile_context>

<pallas_src>
import functools

import jax
import jax.numpy as jnp
from jax.experimental import pallas as pl
from jax.experimental.pallas import tpu as pltpu

STATE_DIM = 8
ACTION_DIM = 4
H1 = 64
H2 = 16

LANE = 128  # TPU lane width


def _round_up(x, m):
    return pl.cdiv(x, m) * m


def qnet_kernel(x_ref, w1_ref, b1_ref, w2_ref, b2_ref, w3_ref, b3_ref, oT_ref):
    # x_ref: (TILE_B, STATE_DIM) in the module's native layout.  The transpose
    # inside the first dot puts batch on the 128-wide lane axis; everything
    # downstream is (features, TILE_B) -> lane-dense vregs, unmasked stores.
    # hidden: Linear(STATE_DIM, 64) + ReLU                       (MXU, K=8)
    h = jnp.dot(w1_ref[...], x_ref[...].T,
                preferred_element_type=jnp.float32) + b1_ref[...]
    h = jnp.maximum(h, 0.0)
    # hidden1: Linear(64, 16) + ReLU                             (MXU, K=64)
    h = jnp.dot(w2_ref[...], h,
                preferred_element_type=jnp.float32) + b2_ref[...]
    h = jnp.maximum(h, 0.0)
    # out: Linear(16, ACTION_DIM), no activation                 (MXU, K=16)
    oT_ref[...] = jnp.dot(w3_ref[...], h,
                          preferred_element_type=jnp.float32) + b3_ref[...]


@functools.partial(jax.jit, static_argnames=("tile_b",))
def qnet_forward(x, params, tile_b=8192):
    """x: (B, STATE_DIM) f32 -> (B, ACTION_DIM) f32."""
    w1, b1, w2, b2, w3, b3 = params  # weights (out, in), biases (out, 1)
    B = x.shape[0]
    if B == 0:  # guard the empty-batch edge case
        return jnp.zeros((0, ACTION_DIM), x.dtype)

    tile_b = max(LANE, _round_up(int(tile_b), LANE))

    # Pad only to the 128-lane granule (skipped entirely when B % 128 == 0).
    Bp = _round_up(B, LANE)
    if Bp != B:
        x = jnp.pad(x, ((0, Bp - B), (0, 0)))

    # Tile selection: as large as the VMEM budget allows, but keep >= 2 grid
    # steps when possible so v7x's two TensorCores both get work.  The last
    # tile may be ragged (Pallas masks the out-of-bounds writes).
    tb = min(tile_b, Bp)
    if Bp >= 2 * LANE:
        tb = min(tb, _round_up(pl.cdiv(Bp, 2), LANE))
    grid = (pl.cdiv(Bp, tb),)

    const2d = lambda shape: pl.BlockSpec(shape, lambda i: (0, 0))  # VMEM-resident

    out_T = pl.pallas_call(
        qnet_kernel,
        out_shape=jax.ShapeDtypeStruct((ACTION_DIM, Bp), jnp.float32),
        grid=grid,
        in_specs=[
            # x tiled over batch in its native layout (no wrapper transpose).
            pl.BlockSpec((tb, STATE_DIM), lambda i: (i, 0)),
            const2d(w1.shape), const2d(b1.shape),
            const2d(w2.shape), const2d(b2.shape),
            const2d(w3.shape), const2d(b3.shape),
        ],
        out_specs=pl.BlockSpec((ACTION_DIM, tb), lambda i: (0, i)),
        compiler_params=pltpu.CompilerParams(
            dimension_semantics=("parallel",),
            vmem_limit_bytes=32 * 1024 * 1024,  # safe on v5e/v6e/v7x
        ),
    )(x, w1, b1, w2, b2, w3, b3)

    # (ACTION_DIM, B) -> (B, ACTION_DIM): tiny wrapper pass over the 4-wide
    # result; callers that accept the transposed layout can use out_T[:, :B].
    return out_T[:, :B].T


def init_params(key):
    """Deterministic xavier-uniform weights + bias=0.01 (mirrors init_weights).

    Weights stored as (out_features, in_features), same as nn.Linear.
    """
    def xavier(k, fan_out, fan_in):
        bound = (6.0 / (fan_in + fan_out)) ** 0.5
        return jax.random.uniform(k, (fan_out, fan_in), jnp.float32, -bound, bound)

    k1, k2, k3 = jax.random.split(key, 3)
    w1 = xavier(k1, H1, STATE_DIM)
    b1 = jnp.full((H1, 1), 0.01, jnp.float32)
    w2 = xavier(k2, H2, H1)
    b2 = jnp.full((H2, 1), 0.01, jnp.float32)
    w3 = xavier(k3, ACTION_DIM, H2)
    b3 = jnp.full((ACTION_DIM, 1), 0.01, jnp.float32)
    return (w1, b1, w2, b2, w3, b3)


def qnet_reference(x, params):
    w1, b1, w2, b2, w3, b3 = params
    h = jnp.maximum(x @ w1.T + b1[:, 0], 0.0)
    h = jnp.maximum(h @ w2.T + b2[:, 0], 0.0)
    return h @ w3.T + b3[:, 0]


if __name__ == "__main__":
    key = jax.random.PRNGKey(0)
    kx, kx2, kp = jax.random.split(key, 3)
    params = init_params(kp)

    # Tiny batch (B=2): single padded 128-wide tile.
    B = 2
    x = jax.random.normal(kx, (B, STATE_DIM), jnp.float32)
    out = jax.block_until_ready(qnet_forward(x, params))
    ref = qnet_reference(x, params)
    assert out.shape == (B, ACTION_DIM)
    assert jnp.allclose(out, ref, atol=1e-5, rtol=1e-5)

    # Non-multiple-of-128 batch: exercises lane-granule padding, the >=2-step
    # grid (megacore-ready on v7x) and a ragged final tile.
    B2 = 300
    x2 = jax.random.normal(kx2, (B2, STATE_DIM), jnp.float32)
    out2 = jax.block_until_ready(qnet_forward(x2, params))
    ref2 = qnet_reference(x2, params)
    assert out2.shape == (B2, ACTION_DIM)
    assert jnp.allclose(out2, ref2, atol=1e-5, rtol=1e-5)

    print("KERNEL_OK")
</pallas_src>

<mosaic_0001>
module attributes {stable_mosaic.version = 11 : i64} {
  func.func @qnet_kernel(%arg0: i32, %arg1: memref<128x8xf32, #tpu.memory_space<vmem>>, %arg2: memref<64x8xf32, #tpu.memory_space<vmem>>, %arg3: memref<64x1xf32, #tpu.memory_space<vmem>>, %arg4: memref<16x64xf32, #tpu.memory_space<vmem>>, %arg5: memref<16x1xf32, #tpu.memory_space<vmem>>, %arg6: memref<4x16xf32, #tpu.memory_space<vmem>>, %arg7: memref<4x1xf32, #tpu.memory_space<vmem>>, %arg8: memref<4x128xf32, #tpu.memory_space<vmem>>) attributes {dimension_semantics = [#tpu.dimension_semantics<parallel>], iteration_bounds = array<i64: 1>, scalar_prefetch = 0 : i64, scratch_operands = 0 : i64, tpu.core_type = #tpu.core_type<tc>, window_params = [{transform_indices = @transform_0, window_bounds = array<i64: 128, 8>}, {pipeline_mode = #tpu.pipeline_mode<synchronous>, transform_indices = @transform_1, window_bounds = array<i64: 64, 8>}, {pipeline_mode = #tpu.pipeline_mode<synchronous>, transform_indices = @transform_2, window_bounds = array<i64: 64, 1>}, {pipeline_mode = #tpu.pipeline_mode<synchronous>, transform_indices = @transform_3, window_bounds = array<i64: 16, 64>}, {pipeline_mode = #tpu.pipeline_mode<synchronous>, transform_indices = @transform_4, window_bounds = array<i64: 16, 1>}, {pipeline_mode = #tpu.pipeline_mode<synchronous>, transform_indices = @transform_5, window_bounds = array<i64: 4, 16>}, {pipeline_mode = #tpu.pipeline_mode<synchronous>, transform_indices = @transform_6, window_bounds = array<i64: 4, 1>}, {transform_indices = @transform_7, window_bounds = array<i64: 4, 128>}]} {
    %c0 = arith.constant 0 : index
    %c0_0 = arith.constant 0 : index
    %0 = vector.load %arg2[%c0, %c0_0] : memref<64x8xf32, #tpu.memory_space<vmem>>, vector<64x8xf32>
    %c0_1 = arith.constant 0 : index
    %c0_2 = arith.constant 0 : index
    %1 = vector.load %arg1[%c0_1, %c0_2] : memref<128x8xf32, #tpu.memory_space<vmem>>, vector<128x8xf32>
    %2 = tpu.transpose %1, [1, 0] : vector<128x8xf32> -> vector<8x128xf32>
    %cst = arith.constant dense<0.000000e+00> : vector<64x128xf32>
    %3 = tpu.matmul %0, %2, %cst {dimension_numbers = #tpu.dot_dimension_numbers<[1], [0], [0], [1], [0, 0, 1, 1], [], []>} : vector<64x8xf32>, vector<8x128xf32>, vector<64x128xf32> -> vector<64x128xf32>
    %c0_3 = arith.constant 0 : index
    %c0_4 = arith.constant 0 : index
    %4 = vector.load %arg3[%c0_3, %c0_4] : memref<64x1xf32, #tpu.memory_space<vmem>>, vector<64x1xf32>
    %5 = vector.broadcast %4 : vector<64x1xf32> to vector<64x128xf32>
    %6 = arith.addf %3, %5 : vector<64x128xf32>
    %cst_5 = arith.constant 0.000000e+00 : f32
    %7 = vector.broadcast %cst_5 : f32 to vector<64x128xf32>
    %8 = arith.maximumf %6, %7 : vector<64x128xf32>
    %c0_6 = arith.constant 0 : index
    %c0_7 = arith.constant 0 : index
    %9 = vector.load %arg4[%c0_6, %c0_7] : memref<16x64xf32, #tpu.memory_space<vmem>>, vector<16x64xf32>
    %cst_8 = arith.constant dense<0.000000e+00> : vector<16x128xf32>
    %10 = tpu.matmul %9, %8, %cst_8 {dimension_numbers = #tpu.dot_dimension_numbers<[1], [0], [0], [1], [0, 0, 1, 1], [], []>} : vector<16x64xf32>, vector<64x128xf32>, vector<16x128xf32> -> vector<16x128xf32>
    %c0_9 = arith.constant 0 : index
    %c0_10 = arith.constant 0 : index
    %11 = vector.load %arg5[%c0_9, %c0_10] : memref<16x1xf32, #tpu.memory_space<vmem>>, vector<16x1xf32>
    %12 = vector.broadcast %11 : vector<16x1xf32> to vector<16x128xf32>
    %13 = arith.addf %10, %12 : vector<16x128xf32>
    %cst_11 = arith.constant 0.000000e+00 : f32
    %14 = vector.broadcast %cst_11 : f32 to vector<16x128xf32>
    %15 = arith.maximumf %13, %14 : vector<16x128xf32>
    %c0_12 = arith.constant 0 : index
    %c0_13 = arith.constant 0 : index
    %16 = vector.load %arg6[%c0_12, %c0_13] : memref<4x16xf32, #tpu.memory_space<vmem>>, vector<4x16xf32>
    %cst_14 = arith.constant dense<0.000000e+00> : vector<4x128xf32>
    %17 = tpu.matmul %16, %15, %cst_14 {dimension_numbers = #tpu.dot_dimension_numbers<[1], [0], [0], [1], [0, 0, 1, 1], [], []>} : vector<4x16xf32>, vector<16x128xf32>, vector<4x128xf32> -> vector<4x128xf32>
    %c0_15 = arith.constant 0 : index
    %c0_16 = arith.constant 0 : index
    %18 = vector.load %arg7[%c0_15, %c0_16] : memref<4x1xf32, #tpu.memory_space<vmem>>, vector<4x1xf32>
    %19 = vector.broadcast %18 : vector<4x1xf32> to vector<4x128xf32>
    %20 = arith.addf %17, %19 : vector<4x128xf32>
    %c0_17 = arith.constant 0 : index
    %c0_18 = arith.constant 0 : index
    %21 = vector.load %arg8[%c0_17, %c0_18] : memref<4x128xf32, #tpu.memory_space<vmem>>, vector<4x128xf32>
    tpu.vector_store %arg8[%c0_17, %c0_18], %20 {strides = array<i32>} : memref<4x128xf32, #tpu.memory_space<vmem>>, vector<4x128xf32>,
    return
  }
  func.func @transform_0(%arg0: i32) -> (i32, i32) {
    %c0_i32 = arith.constant 0 : i32
    %c0_i32_0 = arith.constant 0 : i32
    return %arg0, %c0_i32 : i32, i32
  }
  func.func @transform_1(%arg0: i32) -> (i32, i32) {
    %c0_i32 = arith.constant 0 : i32
    %c0_i32_0 = arith.constant 0 : i32
    %c0_i32_1 = arith.constant 0 : i32
    return %c0_i32, %c0_i32_0 : i32, i32
  }
  func.func @transform_2(%arg0: i32) -> (i32, i32) {
    %c0_i32 = arith.constant 0 : i32
    %c0_i32_0 = arith.constant 0 : i32
    %c0_i32_1 = arith.constant 0 : i32
    return %c0_i32, %c0_i32_0 : i32, i32
  }
  func.func @transform_3(%arg0: i32) -> (i32, i32) {
    %c0_i32 = arith.constant 0 : i32
    %c0_i32_0 = arith.constant 0 : i32
    %c0_i32_1 = arith.constant 0 : i32
    return %c0_i32, %c0_i32_0 : i32, i32
  }
  func.func @transform_4(%arg0: i32) -> (i32, i32) {
    %c0_i32 = arith.constant 0 : i32
    %c0_i32_0 = arith.constant 0 : i32
    %c0_i32_1 = arith.constant 0 : i32
    return %c0_i32, %c0_i32_0 : i32, i32
  }
  func.func @transform_5(%arg0: i32) -> (i32, i32) {
    %c0_i32 = arith.constant 0 : i32
    %c0_i32_0 = arith.constant 0 : i32
    %c0_i32_1 = arith.constant 0 : i32
    return %c0_i32, %c0_i32_0 : i32, i32
  }
  func.func @transform_6(%arg0: i32) -> (i32, i32) {
    %c0_i32 = arith.constant 0 : i32
    %c0_i32_0 = arith.constant 0 : i32
    %c0_i32_1 = arith.constant 0 : i32
    return %c0_i32, %c0_i32_0 : i32, i32
  }
  func.func @transform_7(%arg0: i32) -> (i32, i32) {
    %c0_i32 = arith.constant 0 : i32
    %c0_i32_0 = arith.constant 0 : i32
    return %c0_i32, %arg0 : i32, i32
  }
}

</mosaic_0001>

<llo_original>
// kernel: qnet_forward.1
$region0: #{qnet_forward.1}
  #allocation0 [shape = 'u32[]', space=smem, size = 0x4, offset = 0x4, fixed_abs, tag = 'smem constant byte address 0x4 - core index']
  #allocation1 [shape = 'u32[72,128]{1,0:T(1,128)}', space=vmem, size = 0x9000, scoped, tag = 'internal scratch']
  %s0 = inlined_call_operand.vmem [shape: f32[128,8], index: 0, kind: input, shape index: {}]
  %s1 = inlined_call_operand.vmem [shape: f32[64,8], index: 1, kind: input, shape index: {}]
  %s2 = inlined_call_operand.vmem [shape: f32[64,1], index: 2, kind: input, shape index: {}]
  %s3 = inlined_call_operand.vmem [shape: f32[16,64], index: 3, kind: input, shape index: {}]
  %s4 = inlined_call_operand.vmem [shape: f32[16,1], index: 4, kind: input, shape index: {}]
  %s5 = inlined_call_operand.vmem [shape: f32[4,16], index: 5, kind: input, shape index: {}]
  %s6 = inlined_call_operand.vmem [shape: f32[4,1], index: 6, kind: input, shape index: {}]
  %s7 = inlined_call_operand.vmem [shape: f32[4,128], index: 7, kind: output, shape index: {}]
  %s8 = sld [smem:[#allocation0]]
  $region38: #{qnet_forward.1} parent=0
    _
  %s10 = ssub.s32 1, %s8
  %s11 = scalar_select 0, %s10, %s8
  // Predicated region
  $region2: #{qnet_forward.1} parent=0 // pred_check
    _
  $region3: #{qnet_forward.1} parent=0 // pred_check_branch
    %13 = sbr.rel (0) target = $region5
  $region4: #{qnet_forward.1} parent=0 // pred_region
    _
  $region5: #{qnet_forward.1} parent=0 // pred_fallthru
    _
  // Predicated region
  $region6: #{qnet_forward.1} parent=0 // pred_check
    _
  $region7: #{qnet_forward.1} parent=0 // pred_check_branch
    %15 = sbr.rel (0) target = $region9
  $region8: #{qnet_forward.1} parent=0 // pred_region
    _
  $region9: #{qnet_forward.1} parent=0 // pred_fallthru
    _
  // Predicated region
  $region10: #{qnet_forward.1} parent=0 // pred_check
    _
  $region11: #{qnet_forward.1} parent=0 // pred_check_branch
    %17 = sbr.rel (0) target = $region13
  $region12: #{qnet_forward.1} parent=0 // pred_region
    _
  $region13: #{qnet_forward.1} parent=0 // pred_fallthru
    _
  // Predicated region
  $region14: #{qnet_forward.1} parent=0 // pred_check
    _
  $region15: #{qnet_forward.1} parent=0 // pred_check_branch
    %19 = sbr.rel (0) target = $region17
  $region16: #{qnet_forward.1} parent=0 // pred_region
    _
  $region17: #{qnet_forward.1} parent=0 // pred_fallthru
    _
  // Predicated region
  $region18: #{qnet_forward.1} parent=0 // pred_check
    _
  $region19: #{qnet_forward.1} parent=0 // pred_check_branch
    %21 = sbr.rel (0) target = $region21
  $region20: #{qnet_forward.1} parent=0 // pred_region
    _
  $region21: #{qnet_forward.1} parent=0 // pred_fallthru
    _
  // Predicated region
  $region22: #{qnet_forward.1} parent=0 // pred_check
    _
  $region23: #{qnet_forward.1} parent=0 // pred_check_branch
    %23 = sbr.rel (0) target = $region25
  $region24: #{qnet_forward.1} parent=0 // pred_region
    _
  $region25: #{qnet_forward.1} parent=0 // pred_fallthru
    _
  // Predicated region
  $region26: #{qnet_forward.1} parent=0 // pred_check
    _
  $region27: #{qnet_forward.1} parent=0 // pred_check_branch
    %25 = sbr.rel (0) target = $region29
  $region28: #{qnet_forward.1} parent=0 // pred_region
    _
  $region29: #{qnet_forward.1} parent=0 // pred_fallthru
    _
  %v26 = vld [vmem:[%s1] sm:$0xff]
  %v27 = vld [vmem:[%s1 + $0x8] sm:$0xff]
  %v28 = vld [vmem:[%s1 + $0x10] sm:$0xff]
  %v29 = vld [vmem:[%s1 + $0x18] sm:$0xff]
  %v30 = vld [vmem:[%s1 + $0x20] sm:$0xff]
  %v31 = vld [vmem:[%s1 + $0x28] sm:$0xff]
  %v32 = vld [vmem:[%s1 + $0x30] sm:$0xff]
  %v33 = vld [vmem:[%s1 + $0x38] sm:$0xff]
  %v34 = vld [vmem:[%s0] sm:$0xff]
  %v35 = vld [vmem:[%s0 + $0x8] sm:$0xff]
  %v36 = vld [vmem:[%s0 + $0x10] sm:$0xff]
  %v37 = vld [vmem:[%s0 + $0x18] sm:$0xff]
  %v38 = vld [vmem:[%s0 + $0x20] sm:$0xff]
  %v39 = vld [vmem:[%s0 + $0x28] sm:$0xff]
  %v40 = vld [vmem:[%s0 + $0x30] sm:$0xff]
  %v41 = vld [vmem:[%s0 + $0x38] sm:$0xff]
  %v42 = vld [vmem:[%s0 + $0x40] sm:$0xff]
  %v43 = vld [vmem:[%s0 + $0x48] sm:$0xff]
  %v44 = vld [vmem:[%s0 + $0x50] sm:$0xff]
  %v45 = vld [vmem:[%s0 + $0x58] sm:$0xff]
  %v46 = vld [vmem:[%s0 + $0x60] sm:$0xff]
  %v47 = vld [vmem:[%s0 + $0x68] sm:$0xff]
  %v48 = vld [vmem:[%s0 + $0x70] sm:$0xff]
  %v49 = vld [vmem:[%s0 + $0x78] sm:$0xff]
  %v50 = vld [vmem:[%s2] sm:$0xff]
  %v51 = vld [vmem:[%s2 + $0x8] sm:$0xff]
  %v52 = vld [vmem:[%s2 + $0x10] sm:$0xff]
  %v53 = vld [vmem:[%s2 + $0x18] sm:$0xff]
  %v54 = vld [vmem:[%s2 + $0x20] sm:$0xff]
  %v55 = vld [vmem:[%s2 + $0x28] sm:$0xff]
  %v56 = vld [vmem:[%s2 + $0x30] sm:$0xff]
  %v57 = vld [vmem:[%s2 + $0x38] sm:$0xff]
  %59 = vset.pattern.permute.xlu0 0
  %60 = vperm.xlu0 %59, %v50
  %v61 = vpop.permute.xlu0 %60
  %64 = vset.pattern.permute.xlu0 0
  %65 = vperm.xlu0 %64, %v51
  %v66 = vpop.permute.xlu0 %65
  %69 = vset.pattern.permute.xlu0 0
  %70 = vperm.xlu0 %69, %v52
  %v71 = vpop.permute.xlu0 %70
  %74 = vset.pattern.permute.xlu0 0
  %75 = vperm.xlu0 %74, %v53
  %v76 = vpop.permute.xlu0 %75
  %79 = vset.pattern.permute.xlu0 0
  %80 = vperm.xlu0 %79, %v54
  %v81 = vpop.permute.xlu0 %80
  %84 = vset.pattern.permute.xlu0 0
  %85 = vperm.xlu0 %84, %v55
  %v86 = vpop.permute.xlu0 %85
  %89 = vset.pattern.permute.xlu0 0
  %90 = vperm.xlu0 %89, %v56
  %v91 = vpop.permute.xlu0 %90
  %94 = vset.pattern.permute.xlu0 0
  %95 = vperm.xlu0 %94, %v57
  %v96 = vpop.permute.xlu0 %95
  %vm98 = vcmask 64512
  %v100 = vsel %vm98, %v26, 0
  %v103 = vsel %vm98, %v27, 0
  %v106 = vsel %vm98, %v28, 0
  %v109 = vsel %vm98, %v29, 0
  %v112 = vsel %vm98, %v30, 0
  %v115 = vsel %vm98, %v31, 0
  %v118 = vsel %vm98, %v32, 0
  %v121 = vsel %vm98, %v33, 0
  %v124 = vsel %vm98, %v34, 0
  %v127 = vsel %vm98, %v35, 0
  %v130 = vsel %vm98, %v36, 0
  %v133 = vsel %vm98, %v37, 0
  %v136 = vsel %vm98, %v38, 0
  %v139 = vsel %vm98, %v39, 0
  %v142 = vsel %vm98, %v40, 0
  %v145 = vsel %vm98, %v41, 0
  %v148 = vsel %vm98, %v42, 0
  %v151 = vsel %vm98, %v43, 0
  %v154 = vsel %vm98, %v44, 0
  %v157 = vsel %vm98, %v45, 0
  %v160 = vsel %vm98, %v46, 0
  %v163 = vsel %vm98, %v47, 0
  %v166 = vsel %vm98, %v48, 0
  %v169 = vsel %vm98, %v49, 0
  %171 = vmatpush.xpose.msra.mxu0 %v169
  %172 = vmatpush.xpose.msra.mxu0 %v166
  %173 = vmatpush.xpose.msra.mxu0 %v163
  %174 = vmatpush.xpose.msra.mxu0 %v160
  %175 = vmatpush.xpose.msra.mxu0 %v157
  %176 = vmatpush.xpose.msra.mxu0 %v154
  %177 = vmatpush.xpose.msra.mxu0 %v151
  %178 = vmatpush.xpose.msra.mxu0 %v148
  %179 = vmatpush.xpose.msra.mxu0 %v145
  %180 = vmatpush.xpose.msra.mxu0 %v142
  %181 = vmatpush.xpose.msra.mxu0 %v139
  %182 = vmatpush.xpose.msra.mxu0 %v136
  %183 = vmatpush.xpose.msra.mxu0 %v133
  %184 = vmatpush.xpose.msra.mxu0 %v130
  %185 = vmatpush.xpose.msra.mxu0 %v127
  %186 = vmatpush.xpose.msra.mxu0 %v124
  %187 = vmatmul.f32.gmra.mxu0 %v100
  %v188 = vpop.f32.mrf.mxu0
  %v189 = vadd.f32 %v61, %v188
  %190 = vmatmul.f32.gmra.mxu0 %v103
  %v191 = vpop.f32.mrf.mxu0
  %v192 = vadd.f32 %v66, %v191
  %193 = vmatmul.f32.gmra.mxu0 %v106
  %v194 = vpop.f32.mrf.mxu0
  %v195 = vadd.f32 %v71, %v194
  %196 = vmatmul.f32.gmra.mxu0 %v109
  %v197 = vpop.f32.mrf.mxu0
  %v198 = vadd.f32 %v76, %v197
  %199 = vmatmul.f32.gmra.mxu0 %v112
  %v200 = vpop.f32.mrf.mxu0
  %v201 = vadd.f32 %v81, %v200
  %202 = vmatmul.f32.gmra.mxu0 %v115
  %v203 = vpop.f32.mrf.mxu0
  %v204 = vadd.f32 %v86, %v203
  %205 = vmatmul.f32.gmra.mxu0 %v118
  %v206 = vpop.f32.mrf.mxu0
  %v207 = vadd.f32 %v91, %v206
  %208 = vmatmul.f32.gmra.mxu0 %v121
  %v209 = vpop.f32.mrf.mxu0
  %v210 = vadd.f32 %v96, %v209
  %211 = vdwg.mxu0
  %v212 = vmax.f32 %v189, 0.0
  %v213 = vmax.f32 %v192, 0.0
  %v214 = vmax.f32 %v195, 0.0
  %v215 = vmax.f32 %v198, 0.0
  %v216 = vmax.f32 %v201, 0.0
  %v217 = vmax.f32 %v204, 0.0
  %v218 = vmax.f32 %v207, 0.0
  %v219 = vmax.f32 %v210, 0.0
  %v220 = vld [vmem:[%s3] sm:$0xff]
  %v221 = vld [vmem:[%s3 + $0x8] sm:$0xff]
  %v222 = vld [vmem:[%s4] sm:$0xff]
  %v223 = vld [vmem:[%s4 + $0x8] sm:$0xff]
  %225 = vset.pattern.permute.xlu0 0
  %226 = vperm.xlu0 %225, %v222
  %v227 = vpop.permute.xlu0 %226
  %230 = vset.pattern.permute.xlu0 0
  %231 = vperm.xlu0 %230, %v223
  %v232 = vpop.permute.xlu0 %231
  %vm234 = vcmask 523264
  %v236 = vsel %vm234, %v220, 0
  %v239 = vsel %vm234, %v221, 0
  %241 = vmatpush.msra.mxu0 0.0
  %242 = vmatpush.msra.mxu0 0.0
  %243 = vmatpush.msra.mxu0 0.0
  %244 = vmatpush.msra.mxu0 0.0
  %245 = vmatpush.msra.mxu0 0.0
  %246 = vmatpush.msra.mxu0 0.0
  %247 = vmatpush.msra.mxu0 0.0
  %248 = vmatpush.msra.mxu0 0.0
  %249 = vmatpush.msra.mxu0 %v219
  %250 = vmatpush.msra.mxu0 %v218
  %251 = vmatpush.msra.mxu0 %v217
  %252 = vmatpush.msra.mxu0 %v216
  %253 = vmatpush.msra.mxu0 %v215
  %254 = vmatpush.msra.mxu0 %v214
  %255 = vmatpush.msra.mxu0 %v213
  %256 = vmatpush.msra.mxu0 %v212
  %257 = vmatmul.f32.gmra.mxu0 %v236
  %v258 = vpop.f32.mrf.mxu0
  %v259 = vadd.f32 %v227, %v258
  %260 = vmatmul.f32.gmra.mxu0 %v239
  %v261 = vpop.f32.mrf.mxu0
  %v262 = vadd.f32 %v232, %v261
  %263 = vdwg.mxu0
  %v264 = vmax.f32 %v259, 0.0
  %v265 = vmax.f32 %v262, 0.0
  %v266 = vld [vmem:[%s5] sm:$0xf]
  %v267 = vld [vmem:[%s6] sm:$0xf]
  %269 = vset.pattern.permute.xlu0 0
  %270 = vperm.xlu0 %269, %v267
  %v271 = vpop.permute.xlu0 %270
  %vm273 = vcmask 130048
  %v275 = vsel %vm273, %v266, 0
  %277 = vmatpush.msra.mxu0 0.0
  %278 = vmatpush.msra.mxu0 0.0
  %279 = vmatpush.msra.mxu0 0.0
  %280 = vmatpush.msra.mxu0 0.0
  %281 = vmatpush.msra.mxu0 0.0
  %282 = vmatpush.msra.mxu0 0.0
  %283 = vmatpush.msra.mxu0 0.0
  %284 = vmatpush.msra.mxu0 0.0
  %285 = vmatpush.msra.mxu0 0.0
  %286 = vmatpush.msra.mxu0 0.0
  %287 = vmatpush.msra.mxu0 0.0
  %288 = vmatpush.msra.mxu0 0.0
  %289 = vmatpush.msra.mxu0 0.0
  %290 = vmatpush.msra.mxu0 0.0
  %291 = vmatpush.msra.mxu0 %v265
  %292 = vmatpush.msra.mxu0 %v264
  %293 = vmatmul.f32.gmra.mxu0 %v275
  %v294 = vpop.f32.mrf.mxu0
  %v295 = vadd.f32 %v271, %v294
  %296 = vdwg.mxu0
  %297 = vst [vmem:[%s7] sm:$0xf] %v295
  // Predicated region
  $region30: #{qnet_forward.1} parent=0 // pred_check
    _
  $region31: #{qnet_forward.1} parent=0 // pred_check_branch
    %299 = sbr.rel (0) target = $region33
  $region32: #{qnet_forward.1} parent=0 // pred_region
    _
  $region33: #{qnet_forward.1} parent=0 // pred_fallthru
    _
  // Predicated region
  $region34: #{qnet_forward.1} parent=0 // pred_check
    _
  $region35: #{qnet_forward.1} parent=0 // pred_check_branch
    %301 = sbr.rel (0) target = $region37
  $region36: #{qnet_forward.1} parent=0 // pred_region
    _
  $region37: #{qnet_forward.1} parent=0 // pred_fallthru
    _

</llo_original>
